<compile_context>
chip_gen: v5e
topology: v5e:2x2
jax: 0.10.0
libtpu: 0.0.40
codegen_flags: <defaults>
</compile_context>

<pallas_src>
import jax
import jax.numpy as jnp
import numpy as np
from jax import lax
from jax.experimental import pallas as pl
from jax.experimental.pallas import tpu as pltpu

LANES = 128
NCORES = 2             # leading 'parallel' grid axis (2 TCs on v7x; serial elsewhere)
MAX_TILE_ROWS = 1024   # (1024, 128) f32 block = 512 KiB per input per step


def _round_up(x, m):
    return ((x + m - 1) // m) * m


def _rows_for(n):
    return _round_up(max(int(n), 1), LANES) // LANES


# ----------------------------------------------------------------------------
# Fused weighted-reduction Pallas kernel (the loss hot path)
# ----------------------------------------------------------------------------
def _fused_loss_kernel(op_ref, hd_ref, bidx_ref,
                       a_ref, b_ref, wg_ref, wd_ref, o_ref, acc_ref):
    """One grid step = one (tile_rows, 128) block.

    SMEM scalar prefetch (per global block):
        op   : 1 -> L1 block (uses B), 0 -> squared-error block (target folded into A)
        hd   : 1 -> block contains discriminator-slot rows (wd column nonzero)
        bidx : B-slab block index (constant for non-L1 blocks -> DMA elided)
    VMEM inputs:
        a_ref, b_ref : (tile_rows, 128) data blocks
        wg_ref, wd_ref : (tile_rows, 1) per-row weights (coeff / n_elems or 0)
    o_ref   : (1, 2, 8, 128) per-core partial sums [g, d]
    acc_ref : (2, 8, 128) VMEM accumulator (one vreg per output slot)
    """
    i = pl.program_id(1)
    blk = pl.program_id(0) * pl.num_programs(1) + i

    @pl.when(i == 0)
    def _init():
        acc_ref[...] = jnp.zeros_like(acc_ref)

    a = a_ref[...]
    rows = a.shape[0]

    def _accumulate(val):
        # Weighted tree-sum down to one (8, 128) vreg per slot — pure VPU adds.
        acc_ref[0] += jnp.sum((val * wg_ref[...]).reshape(rows // 8, 8, LANES),
                              axis=0)

        @pl.when(hd_ref[blk] != 0)
        def _():
            acc_ref[1] += jnp.sum((val * wd_ref[...]).reshape(rows // 8, 8, LANES),
                                  axis=0)

    @pl.when(op_ref[blk] == 0)          # squared-error block (target pre-folded into A)
    def _mse_block():
        _accumulate(a * a)

    @pl.when(op_ref[blk] != 0)          # L1 block
    def _l1_block():
        _accumulate(jnp.abs(a - b_ref[...]))

    @pl.when(i == pl.num_programs(1) - 1)
    def _finalize():
        o_ref[0] = acc_ref[...]


def fused_weighted_loss(terms):
    """Compute all loss terms in one Pallas pass.

    terms: list of ("mse", pred, target_scalar, coeff, slot)
                or ("l1",  a,    b,             coeff, slot)
    Each term contributes coeff * mean(err) to slot 0 (generator) or 1 (discriminator).
    Returns (g_loss, d_loss) f32 scalars.
    """
    l1_terms = [t for t in terms if t[0] == "l1"]
    mse_terms = [t for t in terms if t[0] == "mse"]

    total_rows = sum(_rows_for(t[1].size) for t in terms)
    # Big enough to amortize per-step overhead, small enough that both cores get
    # work and tile-boundary padding stays bounded.
    tile_rows = int(min(MAX_TILE_ROWS,
                        max(8, _round_up(-(-total_rows // NCORES), 8))))

    a_pieces, b_pieces = [], []
    wg_np, wd_np = [], []

    def _append_data(pieces, flat, rows):
        pad = rows * LANES - int(flat.shape[0])
        pieces.append(flat)
        if pad:  # zero pad: diff 0 (L1) or value 0 (MSE) -> contributes nothing
            pieces.append(jnp.zeros((pad,), jnp.float32))

    def _append_weights(rows, coeff, n, slot):
        w = np.full((rows, 1), float(coeff) / float(n), np.float32)
        z = np.zeros((rows, 1), np.float32)
        if slot == 0:
            wg_np.append(w); wd_np.append(z)
        else:
            wg_np.append(z); wd_np.append(w)

    # ---- L1 region first (A and B aligned row-for-row) ----------------------
    rows_acc = 0
    for _, a, b, coeff, slot in l1_terms:
        n = int(a.size)
        r = _rows_for(n)
        _append_data(a_pieces, jnp.ravel(a).astype(jnp.float32), r)
        _append_data(b_pieces, jnp.ravel(b).astype(jnp.float32), r)
        _append_weights(r, coeff, n, slot)
        rows_acc += r

    # Pad the L1 region to a tile boundary so every block has a uniform op.
    l1_blocks = -(-rows_acc // tile_rows) if rows_acc else 0
    pad_rows = l1_blocks * tile_rows - rows_acc
    if pad_rows:
        a_pieces.append(jnp.zeros((pad_rows * LANES,), jnp.float32))
        b_pieces.append(jnp.zeros((pad_rows * LANES,), jnp.float32))
        wg_np.append(np.zeros((pad_rows, 1), np.float32))
        wd_np.append(np.zeros((pad_rows, 1), np.float32))
        rows_acc += pad_rows

    # ---- MSE region: constant target folded into A; B never streamed --------
    for _, pred, target, coeff, slot in mse_terms:
        n = int(pred.size)
        r = _rows_for(n)
        flat = jnp.ravel(pred).astype(jnp.float32)
        if float(target) != 0.0:
            flat = flat - jnp.float32(target)
        _append_data(a_pieces, flat, r)
        _append_weights(r, coeff, n, slot)
        rows_acc += r

    # ---- Pad to whole tiles and to a multiple of NCORES blocks --------------
    num_blocks = _round_up(max(-(-rows_acc // tile_rows), 1), NCORES)
    pad_rows = num_blocks * tile_rows - rows_acc
    if pad_rows:
        a_pieces.append(jnp.zeros((pad_rows * LANES,), jnp.float32))
        wg_np.append(np.zeros((pad_rows, 1), np.float32))
        wd_np.append(np.zeros((pad_rows, 1), np.float32))
    r_total = num_blocks * tile_rows

    a_slab = jnp.concatenate(a_pieces).reshape(r_total, LANES)
    if l1_blocks:
        b_slab = jnp.concatenate(b_pieces).reshape(l1_blocks * tile_rows, LANES)
    else:
        b_slab = jnp.zeros((tile_rows, LANES), jnp.float32)
    wg_all = np.concatenate(wg_np, axis=0)                   # (r_total, 1)
    wd_all = np.concatenate(wd_np, axis=0)
    wg_arr = jnp.asarray(wg_all)
    wd_arr = jnp.asarray(wd_all)

    # ---- Per-block SMEM metadata (scalar prefetch, built host-side) ---------
    op_arr = np.zeros((num_blocks,), np.int32)
    op_arr[:l1_blocks] = 1                                   # 1 -> L1, 0 -> squared err
    hd_arr = (np.abs(wd_all.reshape(num_blocks, tile_rows)).max(axis=1) > 0
              ).astype(np.int32)                             # block has d-slot rows
    bidx_arr = np.arange(num_blocks, dtype=np.int32)
    bidx_arr[l1_blocks:] = max(l1_blocks - 1, 0)             # reuse last L1 B block

    nb_per_core = num_blocks // NCORES
    out = pl.pallas_call(
        _fused_loss_kernel,
        out_shape=jax.ShapeDtypeStruct((NCORES, 2, 8, LANES), jnp.float32),
        grid_spec=pltpu.PrefetchScalarGridSpec(
            num_scalar_prefetch=3,
            grid=(NCORES, nb_per_core),
            in_specs=[
                pl.BlockSpec((tile_rows, LANES),
                             lambda c, i, op, hd, bx: (c * nb_per_core + i, 0)),
                pl.BlockSpec((tile_rows, LANES),
                             lambda c, i, op, hd, bx: (bx[c * nb_per_core + i], 0)),
                pl.BlockSpec((tile_rows, 1),
                             lambda c, i, op, hd, bx: (c * nb_per_core + i, 0)),
                pl.BlockSpec((tile_rows, 1),
                             lambda c, i, op, hd, bx: (c * nb_per_core + i, 0)),
            ],
            out_specs=pl.BlockSpec((1, 2, 8, LANES),
                                   lambda c, i, op, hd, bx: (c, 0, 0, 0)),
            scratch_shapes=[pltpu.VMEM((2, 8, LANES), jnp.float32)],
        ),
        compiler_params=pltpu.CompilerParams(
            dimension_semantics=("parallel", "arbitrary")),
        cost_estimate=pl.CostEstimate(
            flops=5 * r_total * LANES,
            transcendentals=0,
            bytes_accessed=4 * (a_slab.size + b_slab.size + wg_arr.size
                                + wd_arr.size + NCORES * 2 * 8 * LANES)),
    )(jnp.asarray(op_arr), jnp.asarray(hd_arr), jnp.asarray(bidx_arr),
      a_slab, b_slab, wg_arr, wd_arr)

    g_loss = jnp.sum(out[:, 0])
    d_loss = jnp.sum(out[:, 1])
    return g_loss, d_loss


# ----------------------------------------------------------------------------
# Deterministic synthetic networks (external modules the loss consumes).
# Plain-JAX glue; the fused reduction above is the Pallas hot path.
# ----------------------------------------------------------------------------
def conv1x1(x, w):
    # x: (N, C, H, W), w: (O, C) -> (N, O, H, W)
    return jnp.einsum("nchw,oc->nohw", x, w)


def avg_pool2(x):
    n, c, h, w = x.shape
    return x.reshape(n, c, h // 2, 2, w // 2, 2).mean(axis=(3, 5))


def leaky_relu(x, a=0.2):
    return jnp.where(x >= 0, x, a * x)


class EncoderStub:
    def __init__(self, key, img_ch=3, inst_ch=1, out_ch=3):
        self.w = 0.1 * jax.random.normal(key, (out_ch, img_ch + inst_ch),
                                         dtype=jnp.float32)

    def __call__(self, x_real, instance_map):
        return jnp.tanh(conv1x1(jnp.concatenate((x_real, instance_map), axis=1),
                                self.w))


class GeneratorStub:
    def __init__(self, key, in_ch=8, out_ch=3):
        self.w = 0.1 * jax.random.normal(key, (out_ch, in_ch), dtype=jnp.float32)

    def __call__(self, x):
        return jnp.tanh(conv1x1(x, self.w))


class DiscriminatorStub:
    """Multi-scale discriminator: returns a nested list, last entry is the pred."""

    def __init__(self, key, in_ch=8, n_discriminators=2):
        self.n_discriminators = n_discriminators
        keys = jax.random.split(key, n_discriminators * 3)
        self.params = []
        for d in range(n_discriminators):
            w1 = 0.1 * jax.random.normal(keys[3 * d + 0], (8, in_ch), jnp.float32)
            w2 = 0.1 * jax.random.normal(keys[3 * d + 1], (8, 8), jnp.float32)
            wp = 0.1 * jax.random.normal(keys[3 * d + 2], (1, 8), jnp.float32)
            self.params.append((w1, w2, wp))

    def __call__(self, x):
        outs = []
        cur = x
        for d in range(self.n_discriminators):
            if d > 0:
                cur = avg_pool2(cur)
            w1, w2, wp = self.params[d]
            f1 = leaky_relu(conv1x1(cur, w1))
            f2 = leaky_relu(conv1x1(f1, w2))
            pred = conv1x1(f2, wp)
            outs.append([f1, f2, pred])
        return outs


class VGG19Stub:
    """Returns 5 feature maps at progressively downsampled scales (like VGG19 slices)."""

    def __init__(self, key, in_ch=3, chans=(8, 16, 32, 32, 32)):
        keys = jax.random.split(key, len(chans))
        self.weights = []
        prev = in_ch
        for k, c in zip(keys, chans):
            self.weights.append(0.1 * jax.random.normal(k, (c, prev), jnp.float32))
            prev = c

    def __call__(self, x):
        feats = []
        cur = x
        for i, w in enumerate(self.weights):
            cur = jax.nn.relu(conv1x1(cur, w))
            feats.append(cur)
            if i + 1 < len(self.weights):
                cur = avg_pool2(cur)
        return feats


# ----------------------------------------------------------------------------
# Pix2PixHDLoss (forward-pass semantics of the PyTorch module)
# ----------------------------------------------------------------------------
class Pix2PixHDLoss:
    def __init__(self, vgg, lambda1=10.0, lambda2=10.0, norm_weight_to_one=True):
        self.vgg = vgg
        self.vgg_weights = [1.0 / 32, 1.0 / 16, 1.0 / 8, 1.0 / 4, 1.0]
        lambda0 = 1.0
        scale = max(lambda0, lambda1, lambda2) if norm_weight_to_one else 1.0
        self.lambda0 = lambda0 / scale
        self.lambda1 = lambda1 / scale
        self.lambda2 = lambda2 / scale

    # --- term builders (consumed by the single fused Pallas reduction) -------
    def _adv_terms(self, discriminator_preds, is_real, coeff, slot):
        target = 1.0 if is_real else 0.0
        return [("mse", preds[-1], target, coeff, slot)
                for preds in discriminator_preds]

    def _fm_terms(self, real_preds, fake_preds, coeff):
        terms = []
        for real_features, fake_features in zip(real_preds, fake_preds):
            for rf, ff in zip(real_features, fake_features):
                terms.append(("l1", lax.stop_gradient(rf), ff, coeff, 0))
        return terms

    def _vgg_terms(self, x_a, x_b, coeff):
        # Mirrors the reference exactly: vgg_loss(x_real, x_fake) detaches the
        # FIRST argument's VGG features, and forward() calls vgg_loss(x_fake, x_real).
        feats_a = self.vgg(x_a)
        feats_b = self.vgg(x_b)
        return [("l1", lax.stop_gradient(fa), fb, coeff * w, 0)
                for fa, fb, w in zip(feats_a, feats_b, self.vgg_weights)]

    def __call__(self, x_real, label_map, instance_map, boundary_map,
                 encoder, generator, discriminator):
        feature_map = encoder(x_real, instance_map)
        x_fake = generator(
            jnp.concatenate((label_map, boundary_map, feature_map), axis=1))
        fake_preds_for_g = discriminator(
            jnp.concatenate((label_map, boundary_map, x_fake), axis=1))
        x_fake_det = lax.stop_gradient(x_fake)
        fake_preds_for_d = discriminator(
            jnp.concatenate((label_map, boundary_map, x_fake_det), axis=1))
        real_preds_for_d = discriminator(
            jnp.concatenate((label_map, boundary_map,
                             lax.stop_gradient(x_real)), axis=1))

        terms = []
        # generator loss (slot 0)
        terms += self._adv_terms(fake_preds_for_g, False, self.lambda0, 0)
        terms += self._fm_terms(real_preds_for_d, fake_preds_for_g,
                                self.lambda1 / discriminator.n_discriminators)
        terms += self._vgg_terms(x_fake, x_real, self.lambda2)
        # discriminator loss (slot 1): 0.5 * (adv(real, 1) + adv(fake, 0))
        terms += self._adv_terms(real_preds_for_d, True, 0.5, 1)
        terms += self._adv_terms(fake_preds_for_d, False, 0.5, 1)

        g_loss, d_loss = fused_weighted_loss(terms)
        return g_loss, d_loss, x_fake_det


# ----------------------------------------------------------------------------
# Plain-JAX reference of the PyTorch math (forward value check)
# ----------------------------------------------------------------------------
def _reference_losses(x_real, label_map, instance_map, boundary_map,
                      encoder, generator, discriminator, vgg,
                      lambda0, lambda1, lambda2, vgg_weights):
    mse = lambda x, t: jnp.mean((x - t) ** 2)
    l1 = lambda a, b: jnp.mean(jnp.abs(a - b))
    feature_map = encoder(x_real, instance_map)
    x_fake = generator(jnp.concatenate((label_map, boundary_map, feature_map), axis=1))
    g_in = jnp.concatenate((label_map, boundary_map, x_fake), axis=1)
    fake_g = discriminator(g_in)
    fake_d = discriminator(g_in)   # detach does not change forward values
    real_d = discriminator(jnp.concatenate((label_map, boundary_map, x_real), axis=1))

    def adv(preds, t):
        return sum(mse(p[-1], t) for p in preds)

    fm = sum(l1(rf, ff) for rfs, ffs in zip(real_d, fake_g)
             for rf, ff in zip(rfs, ffs))
    va, vb = vgg(x_fake), vgg(x_real)
    vl = sum(w * l1(a, b) for a, b, w in zip(va, vb, vgg_weights))
    g = (lambda0 * adv(fake_g, 0.0)
         + lambda1 * fm / discriminator.n_discriminators
         + lambda2 * vl)
    d = 0.5 * (adv(real_d, 1.0) + adv(fake_d, 0.0))
    return g, d


if __name__ == "__main__":
    key = jax.random.PRNGKey(0)
    k_x, k_lbl, k_inst, k_bnd, k_enc, k_gen, k_dis, k_vgg = jax.random.split(key, 8)

    N, H, W = 2, 16, 16
    x_real = jax.random.normal(k_x, (N, 3, H, W), dtype=jnp.float32)
    label_map = jax.random.normal(k_lbl, (N, 4, H, W), dtype=jnp.float32)
    instance_map = jax.random.normal(k_inst, (N, 1, H, W), dtype=jnp.float32)
    boundary_map = jax.random.normal(k_bnd, (N, 1, H, W), dtype=jnp.float32)

    encoder = EncoderStub(k_enc)
    generator = GeneratorStub(k_gen, in_ch=4 + 1 + 3)
    discriminator = DiscriminatorStub(k_dis, in_ch=4 + 1 + 3, n_discriminators=2)
    vgg = VGG19Stub(k_vgg)

    loss_fn = Pix2PixHDLoss(vgg=vgg, lambda1=10.0, lambda2=10.0)

    @jax.jit
    def run(xr, lm, im, bm):
        return loss_fn(xr, lm, im, bm, encoder, generator, discriminator)

    g_loss, d_loss, x_fake = run(x_real, label_map, instance_map, boundary_map)
    jax.block_until_ready((g_loss, d_loss, x_fake))

    g_ref, d_ref = _reference_losses(
        x_real, label_map, instance_map, boundary_map,
        encoder, generator, discriminator, vgg,
        loss_fn.lambda0, loss_fn.lambda1, loss_fn.lambda2, loss_fn.vgg_weights)
    assert abs(float(g_loss) - float(g_ref)) <= 1e-4 * (1.0 + abs(float(g_ref)))
    assert abs(float(d_loss) - float(d_ref)) <= 1e-4 * (1.0 + abs(float(d_ref)))
    print("KERNEL_OK")
</pallas_src>

<mosaic_0001>
module attributes {stable_mosaic.version = 11 : i64} {
  func.func @_fused_loss_kernel(%arg0: i32, %arg1: i32, %arg2: memref<4xi32, #tpu.memory_space<smem>>, %arg3: memref<4xi32, #tpu.memory_space<smem>>, %arg4: memref<4xi32, #tpu.memory_space<smem>>, %arg5: memref<80x128xf32, #tpu.memory_space<vmem>>, %arg6: memref<80x128xf32, #tpu.memory_space<vmem>>, %arg7: memref<80x1xf32, #tpu.memory_space<vmem>>, %arg8: memref<80x1xf32, #tpu.memory_space<vmem>>, %arg9: memref<1x2x8x128xf32, #tpu.memory_space<vmem>>, %arg10: memref<2x8x128xf32, #tpu.memory_space<vmem>>) attributes {dimension_semantics = [#tpu.dimension_semantics<parallel>, #tpu.dimension_semantics<arbitrary>], iteration_bounds = array<i64: 2, 2>, scalar_prefetch = 3 : i64, scratch_operands = 1 : i64, tpu.core_type = #tpu.core_type<tc>, window_params = [{transform_indices = @transform_0, window_bounds = array<i64: 80, 128>}, {transform_indices = @transform_1, window_bounds = array<i64: 80, 128>}, {transform_indices = @transform_2, window_bounds = array<i64: 80, 1>}, {transform_indices = @transform_3, window_bounds = array<i64: 80, 1>}, {transform_indices = @transform_4, window_bounds = array<i64: 1, 2, 8, 128>}]} {
    %c2_i32 = arith.constant 2 : i32
    %0 = arith.muli %arg0, %c2_i32 : i32
    %1 = arith.addi %0, %arg1 : i32
    %c0_i32 = arith.constant 0 : i32
    %2 = arith.cmpi eq, %arg1, %c0_i32 : i32
    %3 = arith.extui %2 : i1 to i32
    %c0_i32_0 = arith.constant 0 : i32
    %4 = arith.cmpi ne, %3, %c0_i32_0 : i32
    scf.if %4 {
      %cst = arith.constant 0.000000e+00 : f32
      %19 = vector.broadcast %cst : f32 to vector<2x8x128xf32>
      %c0_7 = arith.constant 0 : index
      %c0_8 = arith.constant 0 : index
      %c0_9 = arith.constant 0 : index
      %20 = vector.load %arg10[%c0_7, %c0_8, %c0_9] : memref<2x8x128xf32, #tpu.memory_space<vmem>>, vector<2x8x128xf32>
      tpu.vector_store %arg10[%c0_7, %c0_8, %c0_9], %19 {strides = array<i32>} : memref<2x8x128xf32, #tpu.memory_space<vmem>>, vector<2x8x128xf32>,
    } else {
    }
    %c0 = arith.constant 0 : index
    %c0_1 = arith.constant 0 : index
    %5 = vector.load %arg5[%c0, %c0_1] : memref<80x128xf32, #tpu.memory_space<vmem>>, vector<80x128xf32>
    %6 = arith.index_cast %1 : i32 to index
    %7 = memref.load %arg2[%6] : memref<4xi32, #tpu.memory_space<smem>>
    %c0_i32_2 = arith.constant 0 : i32
    %8 = arith.cmpi eq, %7, %c0_i32_2 : i32
    %9 = arith.extui %8 : i1 to i32
    %c0_i32_3 = arith.constant 0 : i32
    %10 = arith.cmpi ne, %9, %c0_i32_3 : i32
    scf.if %10 {
      %19 = arith.mulf %5, %5 : vector<80x128xf32>
      %c0_7 = arith.constant 0 : index
      %c0_8 = arith.constant 0 : index
      %c0_9 = arith.constant 0 : index
      %20 = vector.load %arg10[%c0_7, %c0_8, %c0_9] : memref<2x8x128xf32, #tpu.memory_space<vmem>>, vector<1x8x128xf32>
      %21 = vector.shape_cast %20 : vector<1x8x128xf32> to vector<8x128xf32>
      %c0_10 = arith.constant 0 : index
      %c0_11 = arith.constant 0 : index
      %22 = vector.load %arg7[%c0_10, %c0_11] : memref<80x1xf32, #tpu.memory_space<vmem>>, vector<80x1xf32>
      %23 = vector.broadcast %22 : vector<80x1xf32> to vector<80x128xf32>
      %24 = arith.mulf %19, %23 : vector<80x128xf32>
      %25 = vector.shape_cast %24 : vector<80x128xf32> to vector<10x8x128xf32>
      %cst = arith.constant dense<0.000000e+00> : vector<8x128xf32>
      %26 = vector.multi_reduction <add>, %25, %cst [0] : vector<10x8x128xf32> to vector<8x128xf32>
      %27 = arith.addf %21, %26 : vector<8x128xf32>
      %c0_12 = arith.constant 0 : index
      %c0_13 = arith.constant 0 : index
      %c0_14 = arith.constant 0 : index
      %28 = vector.load %arg10[%c0_12, %c0_13, %c0_14] : memref<2x8x128xf32, #tpu.memory_space<vmem>>, vector<1x8x128xf32>
      %29 = vector.shape_cast %28 : vector<1x8x128xf32> to vector<8x128xf32>
      %30 = vector.shape_cast %27 : vector<8x128xf32> to vector<1x8x128xf32>
      tpu.vector_store %arg10[%c0_12, %c0_13, %c0_14], %30 {strides = array<i32>} : memref<2x8x128xf32, #tpu.memory_space<vmem>>, vector<1x8x128xf32>,
      %31 = arith.index_cast %1 : i32 to index
      %32 = memref.load %arg3[%31] : memref<4xi32, #tpu.memory_space<smem>>
      %c0_i32_15 = arith.constant 0 : i32
      %33 = arith.cmpi ne, %32, %c0_i32_15 : i32
      %34 = arith.extui %33 : i1 to i32
      %c0_i32_16 = arith.constant 0 : i32
      %35 = arith.cmpi ne, %34, %c0_i32_16 : i32
      scf.if %35 {
        %c1 = arith.constant 1 : index
        %c0_17 = arith.constant 0 : index
        %c0_18 = arith.constant 0 : index
        %36 = vector.load %arg10[%c1, %c0_17, %c0_18] : memref<2x8x128xf32, #tpu.memory_space<vmem>>, vector<1x8x128xf32>
        %37 = vector.shape_cast %36 : vector<1x8x128xf32> to vector<8x128xf32>
        %c0_19 = arith.constant 0 : index
        %c0_20 = arith.constant 0 : index
        %38 = vector.load %arg8[%c0_19, %c0_20] : memref<80x1xf32, #tpu.memory_space<vmem>>, vector<80x1xf32>
        %39 = vector.broadcast %38 : vector<80x1xf32> to vector<80x128xf32>
        %40 = arith.mulf %19, %39 : vector<80x128xf32>
        %41 = vector.shape_cast %40 : vector<80x128xf32> to vector<10x8x128xf32>
        %cst_21 = arith.constant dense<0.000000e+00> : vector<8x128xf32>
        %42 = vector.multi_reduction <add>, %41, %cst_21 [0] : vector<10x8x128xf32> to vector<8x128xf32>
        %43 = arith.addf %37, %42 : vector<8x128xf32>
        %c1_22 = arith.constant 1 : index
        %c0_23 = arith.constant 0 : index
        %c0_24 = arith.constant 0 : index
        %44 = vector.load %arg10[%c1_22, %c0_23, %c0_24] : memref<2x8x128xf32, #tpu.memory_space<vmem>>, vector<1x8x128xf32>
        %45 = vector.shape_cast %44 : vector<1x8x128xf32> to vector<8x128xf32>
        %46 = vector.shape_cast %43 : vector<8x128xf32> to vector<1x8x128xf32>
        tpu.vector_store %arg10[%c1_22, %c0_23, %c0_24], %46 {strides = array<i32>} : memref<2x8x128xf32, #tpu.memory_space<vmem>>, vector<1x8x128xf32>,
      } else {
      }
    } else {
    }
    %11 = arith.index_cast %1 : i32 to index
    %12 = memref.load %arg2[%11] : memref<4xi32, #tpu.memory_space<smem>>
    %c0_i32_4 = arith.constant 0 : i32
    %13 = arith.cmpi ne, %12, %c0_i32_4 : i32
    %14 = arith.extui %13 : i1 to i32
    %c0_i32_5 = arith.constant 0 : i32
    %15 = arith.cmpi ne, %14, %c0_i32_5 : i32
    scf.if %15 {
      %c0_7 = arith.constant 0 : index
      %c0_8 = arith.constant 0 : index
      %19 = vector.load %arg6[%c0_7, %c0_8] : memref<80x128xf32, #tpu.memory_space<vmem>>, vector<80x128xf32>
      %20 = arith.subf %5, %19 : vector<80x128xf32>
      %21 = math.absf %20 : vector<80x128xf32>
      %c0_9 = arith.constant 0 : index
      %c0_10 = arith.constant 0 : index
      %c0_11 = arith.constant 0 : index
      %22 = vector.load %arg10[%c0_9, %c0_10, %c0_11] : memref<2x8x128xf32, #tpu.memory_space<vmem>>, vector<1x8x128xf32>
      %23 = vector.shape_cast %22 : vector<1x8x128xf32> to vector<8x128xf32>
      %c0_12 = arith.constant 0 : index
      %c0_13 = arith.constant 0 : index
      %24 = vector.load %arg7[%c0_12, %c0_13] : memref<80x1xf32, #tpu.memory_space<vmem>>, vector<80x1xf32>
      %25 = vector.broadcast %24 : vector<80x1xf32> to vector<80x128xf32>
      %26 = arith.mulf %21, %25 : vector<80x128xf32>
      %27 = vector.shape_cast %26 : vector<80x128xf32> to vector<10x8x128xf32>
      %cst = arith.constant dense<0.000000e+00> : vector<8x128xf32>
      %28 = vector.multi_reduction <add>, %27, %cst [0] : vector<10x8x128xf32> to vector<8x128xf32>
      %29 = arith.addf %23, %28 : vector<8x128xf32>
      %c0_14 = arith.constant 0 : index
      %c0_15 = arith.constant 0 : index
      %c0_16 = arith.constant 0 : index
      %30 = vector.load %arg10[%c0_14, %c0_15, %c0_16] : memref<2x8x128xf32, #tpu.memory_space<vmem>>, vector<1x8x128xf32>
      %31 = vector.shape_cast %30 : vector<1x8x128xf32> to vector<8x128xf32>
      %32 = vector.shape_cast %29 : vector<8x128xf32> to vector<1x8x128xf32>
      tpu.vector_store %arg10[%c0_14, %c0_15, %c0_16], %32 {strides = array<i32>} : memref<2x8x128xf32, #tpu.memory_space<vmem>>, vector<1x8x128xf32>,
      %33 = arith.index_cast %1 : i32 to index
      %34 = memref.load %arg3[%33] : memref<4xi32, #tpu.memory_space<smem>>
      %c0_i32_17 = arith.constant 0 : i32
      %35 = arith.cmpi ne, %34, %c0_i32_17 : i32
      %36 = arith.extui %35 : i1 to i32
      %c0_i32_18 = arith.constant 0 : i32
      %37 = arith.cmpi ne, %36, %c0_i32_18 : i32
      scf.if %37 {
        %c1 = arith.constant 1 : index
        %c0_19 = arith.constant 0 : index
        %c0_20 = arith.constant 0 : index
        %38 = vector.load %arg10[%c1, %c0_19, %c0_20] : memref<2x8x128xf32, #tpu.memory_space<vmem>>, vector<1x8x128xf32>
        %39 = vector.shape_cast %38 : vector<1x8x128xf32> to vector<8x128xf32>
        %c0_21 = arith.constant 0 : index
        %c0_22 = arith.constant 0 : index
        %40 = vector.load %arg8[%c0_21, %c0_22] : memref<80x1xf32, #tpu.memory_space<vmem>>, vector<80x1xf32>
        %41 = vector.broadcast %40 : vector<80x1xf32> to vector<80x128xf32>
        %42 = arith.mulf %21, %41 : vector<80x128xf32>
        %43 = vector.shape_cast %42 : vector<80x128xf32> to vector<10x8x128xf32>
        %cst_23 = arith.constant dense<0.000000e+00> : vector<8x128xf32>
        %44 = vector.multi_reduction <add>, %43, %cst_23 [0] : vector<10x8x128xf32> to vector<8x128xf32>
        %45 = arith.addf %39, %44 : vector<8x128xf32>
        %c1_24 = arith.constant 1 : index
        %c0_25 = arith.constant 0 : index
        %c0_26 = arith.constant 0 : index
        %46 = vector.load %arg10[%c1_24, %c0_25, %c0_26] : memref<2x8x128xf32, #tpu.memory_space<vmem>>, vector<1x8x128xf32>
        %47 = vector.shape_cast %46 : vector<1x8x128xf32> to vector<8x128xf32>
        %48 = vector.shape_cast %45 : vector<8x128xf32> to vector<1x8x128xf32>
        tpu.vector_store %arg10[%c1_24, %c0_25, %c0_26], %48 {strides = array<i32>} : memref<2x8x128xf32, #tpu.memory_space<vmem>>, vector<1x8x128xf32>,
      } else {
      }
    } else {
    }
    %c1_i32 = arith.constant 1 : i32
    %16 = arith.cmpi eq, %arg1, %c1_i32 : i32
    %17 = arith.extui %16 : i1 to i32
    %c0_i32_6 = arith.constant 0 : i32
    %18 = arith.cmpi ne, %17, %c0_i32_6 : i32
    scf.if %18 {
      %c0_7 = arith.constant 0 : index
      %c0_8 = arith.constant 0 : index
      %c0_9 = arith.constant 0 : index
      %19 = vector.load %arg10[%c0_7, %c0_8, %c0_9] : memref<2x8x128xf32, #tpu.memory_space<vmem>>, vector<2x8x128xf32>
      %c0_10 = arith.constant 0 : index
      %c0_11 = arith.constant 0 : index
      %c0_12 = arith.constant 0 : index
      %c0_13 = arith.constant 0 : index
      %20 = vector.load %arg9[%c0_10, %c0_11, %c0_12, %c0_13] : memref<1x2x8x128xf32, #tpu.memory_space<vmem>>, vector<1x2x8x128xf32>
      %21 = vector.shape_cast %20 : vector<1x2x8x128xf32> to vector<2x8x128xf32>
      %22 = vector.shape_cast %19 : vector<2x8x128xf32> to vector<1x2x8x128xf32>
      tpu.vector_store %arg9[%c0_10, %c0_11, %c0_12, %c0_13], %22 {strides = array<i32>} : memref<1x2x8x128xf32, #tpu.memory_space<vmem>>, vector<1x2x8x128xf32>,
    } else {
    }
    return
  }
  func.func @transform_0(%arg0: i32, %arg1: i32, %arg2: memref<4xi32, #tpu.memory_space<smem>>, %arg3: memref<4xi32, #tpu.memory_space<smem>>, %arg4: memref<4xi32, #tpu.memory_space<smem>>) -> (i32, i32) {
    %c2_i32 = arith.constant 2 : i32
    %0 = arith.muli %arg0, %c2_i32 : i32
    %1 = arith.addi %0, %arg1 : i32
    %c0_i32 = arith.constant 0 : i32
    %c0_i32_0 = arith.constant 0 : i32
    return %1, %c0_i32 : i32, i32
  }
  func.func @transform_1(%arg0: i32, %arg1: i32, %arg2: memref<4xi32, #tpu.memory_space<smem>>, %arg3: memref<4xi32, #tpu.memory_space<smem>>, %arg4: memref<4xi32, #tpu.memory_space<smem>>) -> (i32, i32) {
    %c2_i32 = arith.constant 2 : i32
    %0 = arith.muli %arg0, %c2_i32 : i32
    %1 = arith.addi %0, %arg1 : i32
    %2 = arith.index_cast %1 : i32 to index
    %3 = memref.load %arg4[%2] : memref<4xi32, #tpu.memory_space<smem>>
    %c0_i32 = arith.constant 0 : i32
    %c0_i32_0 = arith.constant 0 : i32
    return %3, %c0_i32 : i32, i32
  }
  func.func @transform_2(%arg0: i32, %arg1: i32, %arg2: memref<4xi32, #tpu.memory_space<smem>>, %arg3: memref<4xi32, #tpu.memory_space<smem>>, %arg4: memref<4xi32, #tpu.memory_space<smem>>) -> (i32, i32) {
    %c2_i32 = arith.constant 2 : i32
    %0 = arith.muli %arg0, %c2_i32 : i32
    %1 = arith.addi %0, %arg1 : i32
    %c0_i32 = arith.constant 0 : i32
    %c0_i32_0 = arith.constant 0 : i32
    return %1, %c0_i32 : i32, i32
  }
  func.func @transform_3(%arg0: i32, %arg1: i32, %arg2: memref<4xi32, #tpu.memory_space<smem>>, %arg3: memref<4xi32, #tpu.memory_space<smem>>, %arg4: memref<4xi32, #tpu.memory_space<smem>>) -> (i32, i32) {
    %c2_i32 = arith.constant 2 : i32
    %0 = arith.muli %arg0, %c2_i32 : i32
    %1 = arith.addi %0, %arg1 : i32
    %c0_i32 = arith.constant 0 : i32
    %c0_i32_0 = arith.constant 0 : i32
    return %1, %c0_i32 : i32, i32
  }
  func.func @transform_4(%arg0: i32, %arg1: i32, %arg2: memref<4xi32, #tpu.memory_space<smem>>, %arg3: memref<4xi32, #tpu.memory_space<smem>>, %arg4: memref<4xi32, #tpu.memory_space<smem>>) -> (i32, i32, i32, i32) {
    %c0_i32 = arith.constant 0 : i32
    %c0_i32_0 = arith.constant 0 : i32
    %c0_i32_1 = arith.constant 0 : i32
    %c0_i32_2 = arith.constant 0 : i32
    return %arg0, %c0_i32, %c0_i32_0, %c0_i32_1 : i32, i32, i32, i32
  }
}

</mosaic_0001>

<llo_original>
// kernel: run.1
$region0: #{run.1}
  #allocation0 [shape = 'u32[]', space=smem, size = 0x4, offset = 0x4, fixed_abs, tag = 'smem constant byte address 0x4 - core index']
  #allocation1 [shape = 'u32[72,128]{1,0:T(1,128)}', space=vmem, size = 0x9000, scoped, tag = 'internal scratch']
  #allocation2 [shape = 'f32[2,8,128]{2,1,0:T(8,128)}', space=vmem, size = 0x2000, scoped, tag = 'scratch operand']
  #allocation3 [shape = 's32[1]{0}', space=sflag, size = 0x4, scoped, tag = 'scoped memory for run.1']
  #allocation4 [shape = 'u8[512]{0}', space=smem, size = 0x200, scoped, tag = 'prefetched SMEM operand 0']
  #allocation5 [shape = 'u8[512]{0}', space=smem, size = 0x200, scoped, tag = 'prefetched SMEM operand 1']
  #allocation6 [shape = 'u8[512]{0}', space=smem, size = 0x200, scoped, tag = 'prefetched SMEM operand 2']
  %s0 = inlined_call_operand.vmem [shape: s32[4], index: 0, kind: input, shape index: {}]
  %s1 = inlined_call_operand.vmem [shape: s32[4], index: 1, kind: input, shape index: {}]
  %s2 = inlined_call_operand.vmem [shape: s32[4], index: 2, kind: input, shape index: {}]
  %s3 = inlined_call_operand.vmem [shape: f32[320,128], index: 3, kind: input, shape index: {}]
  %s4 = inlined_call_operand.vmem [shape: f32[160,128], index: 4, kind: input, shape index: {}]
  %s5 = inlined_call_operand.vmem [shape: f32[320,1], index: 5, kind: input, shape index: {}]
  %s6 = inlined_call_operand.vmem [shape: f32[320,1], index: 6, kind: input, shape index: {}]
  %s7 = inlined_call_operand.vmem [shape: f32[2,2,8,128], index: 7, kind: output, shape index: {}]
  %s8 = sld [smem:[#allocation0]]
  $region73: #{run.1} parent=0
    _
  %s10 = ssub.s32 1, %s8
  %s11 = scalar_select 0, %s10, %s8
  %s13 = sshll.u32 %s0, 4
  %s14 = int_to_ptr.vmem [resolvable:$true] %s13
  %16 = dma.vmem_to_smem %s14, 16, [#allocation4], [#allocation3]
  %s18 = sshll.u32 %s1, 4
  %s19 = int_to_ptr.vmem [resolvable:$true] %s18
  %21 = dma.vmem_to_smem %s19, 16, [#allocation5], [#allocation3]
  %s23 = sshll.u32 %s2, 4
  %s24 = int_to_ptr.vmem [resolvable:$true] %s23
  %26 = dma.vmem_to_smem %s24, 16, [#allocation6], [#allocation3]
  %28 = dma.done [#allocation3], 48
  %29 = sfence
  loop: start=0, step=1, limit=6
  $region2: #{run.1} parent=0 // loop_pre_header
    _
  $region3: #{run.1} parent=0 // loop_header
    %s31 = sphi 0, %s35
    %p32 = scmp.ge.s32.totalorder %s31, 6
    %s38 = sphi 0, %s50
    %s39 = sphi 0, %s46
    %s40 = sphi 0, %s38
    %s41 = sphi 0, %s39
    %s42 = sphi 0, %s40
    %s43 = sphi 0, %s41
    %s57 = sphi 0, %s59
    %s60 = sphi 0, %s57
    %s61 = sphi 0, %s60
    %s77 = sphi 0, %s61
    %s89 = sphi 0, %s91
    %s92 = sphi 0, %s89
    %s93 = sphi 0, %s92
    %s109 = sphi 0, %s93
    %s119 = sphi 0, %s121
    %s122 = sphi 0, %s119
    %s123 = sphi 0, %s122
    %s139 = sphi 0, %s123
    %s149 = sphi 0, %s151
    %s152 = sphi 0, %s149
    %s153 = sphi 0, %s152
    %s169 = sphi 0, %s153
    %s175 = sphi 0, %s177
    %s178 = sphi 0, %s175
    %s179 = sphi 0, %s178
    %s195 = sphi 0, %s179
  $region4: #{run.1} parent=0 // loop_header_branch
    %34 = sbr.rel (%p32) target = $region8
  $region5: #{run.1} parent=0 // loop_body
    %s36 = ssub.s32 %s31, 1
    %s37 = ssub.s32 %s31, 2
    %s44 = sadd.s32 1, %s39
    %p45 = scmp.ge.s32.totalorder %s44, 2
    %s46 = scalar_select %p45, 0, %s44
    %s47 = sadd.s32 1, %s38
    %s48 = scalar_select %p45, %s47, %s38
    %p49 = scmp.ge.s32.totalorder %s48, 2
    %s50 = scalar_select %p49, 0, %s48
    %s51 = smul.u32 %s38, 2
    %s52 = sadd.s32 %s51, %s39
    %s53 = smul.u32 %s50, 2
    %s54 = sadd.s32 %s53, %s46
    %s55 = ssub.s32 %s52, %s54
    %p56 = scmp.eq.s32.totalorder %s55, 0
    %s58 = sadd.s32 %s57, 1
    %s59 = scalar_select %p56, %s57, %s58
    %p62 = pneg %p56
    %p63 = scmp.eq.s32.totalorder %s31, 3
    %p64 = por %p62, %p63
    %p65 = scmp.ne.s32.totalorder %s57, %s60
    %p66 = scmp.eq.s32.totalorder %s31, 0
    %p67 = por %p65, %p66
    %p68 = scmp.ne.s32.totalorder %s57, %s60
    %p69 = scmp.eq.s32.totalorder %s36, 3
    %p70 = por %p68, %p69
    %p71 = scmp.ne.s32.totalorder %s60, %s61
    %p72 = scmp.eq.s32.totalorder %s36, 0
    %p73 = por %p71, %p72
    %p74 = scmp.ne.s32.totalorder %s60, %s61
    %p75 = scmp.eq.s32.totalorder %s37, 3
    %p76 = por %p74, %p75
    %p78 = scmp.ne.s32.totalorder %s61, %s77
    %p79 = scmp.eq.s32.totalorder %s37, 0
    %p80 = por %p78, %p79
    %s81 = smul.u32 %s38, 2
    %s82 = sadd.s32 %s81, %s39
    %s83 = sld [smem:[#allocation6 + %s82]]
    %s84 = smul.u32 %s50, 2
    %s85 = sadd.s32 %s84, %s46
    %s86 = sld [smem:[#allocation6 + %s85]]
    %s87 = ssub.s32 %s83, %s86
    %p88 = scmp.eq.s32.totalorder %s87, 0
    %s90 = sadd.s32 %s89, 1
    %s91 = scalar_select %p88, %s89, %s90
    %p94 = pneg %p88
    %p95 = scmp.eq.s32.totalorder %s31, 3
    %p96 = por %p94, %p95
    %p97 = scmp.ne.s32.totalorder %s89, %s92
    %p98 = scmp.eq.s32.totalorder %s31, 0
    %p99 = por %p97, %p98
    %p100 = scmp.ne.s32.totalorder %s89, %s92
    %p101 = scmp.eq.s32.totalorder %s36, 3
    %p102 = por %p100, %p101
    %p103 = scmp.ne.s32.totalorder %s92, %s93
    %p104 = scmp.eq.s32.totalorder %s36, 0
    %p105 = por %p103, %p104
    %p106 = scmp.ne.s32.totalorder %s92, %s93
    %p107 = scmp.eq.s32.totalorder %s37, 3
    %p108 = por %p106, %p107
    %p110 = scmp.ne.s32.totalorder %s93, %s109
    %p111 = scmp.eq.s32.totalorder %s37, 0
    %p112 = por %p110, %p111
    %s113 = smul.u32 %s38, 2
    %s114 = sadd.s32 %s113, %s39
    %s115 = smul.u32 %s50, 2
    %s116 = sadd.s32 %s115, %s46
    %s117 = ssub.s32 %s114, %s116
    %p118 = scmp.eq.s32.totalorder %s117, 0
    %s120 = sadd.s32 %s119, 1
    %s121 = scalar_select %p118, %s119, %s120
    %p124 = pneg %p118
    %p125 = scmp.eq.s32.totalorder %s31, 3
    %p126 = por %p124, %p125
    %p127 = scmp.ne.s32.totalorder %s119, %s122
    %p128 = scmp.eq.s32.totalorder %s31, 0
    %p129 = por %p127, %p128
    %p130 = scmp.ne.s32.totalorder %s119, %s122
    %p131 = scmp.eq.s32.totalorder %s36, 3
    %p132 = por %p130, %p131
    %p133 = scmp.ne.s32.totalorder %s122, %s123
    %p134 = scmp.eq.s32.totalorder %s36, 0
    %p135 = por %p133, %p134
    %p136 = scmp.ne.s32.totalorder %s122, %s123
    %p137 = scmp.eq.s32.totalorder %s37, 3
    %p138 = por %p136, %p137
    %p140 = scmp.ne.s32.totalorder %s123, %s139
    %p141 = scmp.eq.s32.totalorder %s37, 0
    %p142 = por %p140, %p141
    %s143 = smul.u32 %s38, 2
    %s144 = sadd.s32 %s143, %s39
    %s145 = smul.u32 %s50, 2
    %s146 = sadd.s32 %s145, %s46
    %s147 = ssub.s32 %s144, %s146
    %p148 = scmp.eq.s32.totalorder %s147, 0
    %s150 = sadd.s32 %s149, 1
    %s151 = scalar_select %p148, %s149, %s150
    %p154 = pneg %p148
    %p155 = scmp.eq.s32.totalorder %s31, 3
    %p156 = por %p154, %p155
    %p157 = scmp.ne.s32.totalorder %s149, %s152
    %p158 = scmp.eq.s32.totalorder %s31, 0
    %p159 = por %p157, %p158
    %p160 = scmp.ne.s32.totalorder %s149, %s152
    %p161 = scmp.eq.s32.totalorder %s36, 3
    %p162 = por %p160, %p161
    %p163 = scmp.ne.s32.totalorder %s152, %s153
    %p164 = scmp.eq.s32.totalorder %s36, 0
    %p165 = por %p163, %p164
    %p166 = scmp.ne.s32.totalorder %s152, %s153
    %p167 = scmp.eq.s32.totalorder %s37, 3
    %p168 = por %p166, %p167
    %p170 = scmp.ne.s32.totalorder %s153, %s169
    %p171 = scmp.eq.s32.totalorder %s37, 0
    %p172 = por %p170, %p171
    %s173 = ssub.s32 %s38, %s50
    %p174 = scmp.eq.s32.totalorder %s173, 0
    %s176 = sadd.s32 %s175, 1
    %s177 = scalar_select %p174, %s175, %s176
    %p180 = pneg %p174
    %p181 = scmp.eq.s32.totalorder %s31, 3
    %p182 = por %p180, %p181
    %p183 = scmp.ne.s32.totalorder %s175, %s178
    %p184 = scmp.eq.s32.totalorder %s31, 0
    %p185 = por %p183, %p184
    %p186 = scmp.ne.s32.totalorder %s175, %s178
    %p187 = scmp.eq.s32.totalorder %s36, 3
    %p188 = por %p186, %p187
    %p189 = scmp.ne.s32.totalorder %s178, %s179
    %p190 = scmp.eq.s32.totalorder %s36, 0
    %p191 = por %p189, %p190
    %p192 = scmp.ne.s32.totalorder %s178, %s179
    %p193 = scmp.eq.s32.totalorder %s37, 3
    %p194 = por %p192, %p193
    %p196 = scmp.ne.s32.totalorder %s179, %s195
    %p197 = scmp.eq.s32.totalorder %s37, 0
    %p198 = por %p196, %p197
    %p199 = scmp.le.s32.totalorder 1, %s31
    %p200 = scmp.lt.s32.totalorder %s31, 5
    %p201 = pnand %p199, %p200
    %p202 = pneg %p201
    // Predicated region
    $region9: #{run.1} parent=5 // pred_check
      _
    $region10: #{run.1} parent=5 // pred_check_branch
      %204 = sbr.rel (%p201) target = $region12
    $region11: #{run.1} parent=5 // pred_region
      %s205 = ssub.s32 %s31, 1
    $region12: #{run.1} parent=5 // pred_fallthru
      _
    %p206 = scmp.lt.s32.totalorder %s31, 4
    // Predicated region
    $region13: #{run.1} parent=5 // pred_check
      %p207 = pneg %p206
    $region14: #{run.1} parent=5 // pred_check_branch
      %209 = sbr.rel (%p207) target = $region16
    $region15: #{run.1} parent=5 // pred_region
      // Predicated region
      $region17: #{run.1} parent=15 // pred_check
        %p210 = pneg %p67
      $region18: #{run.1} parent=15 // pred_check_branch
        %212 = sbr.rel (%p210) target = $region20
      $region19: #{run.1} parent=15 // pred_region
        %s213 = smul.u32 %s38, 2
        %s214 = sadd.s32 %s213, %s39
        %s215 = smul.u32 10, %s214
        %p216 = scmp.lt.s32.totalorder %s215, 39
        %s217 = scalar_select %p216, %s215, 39
        %s218 = smul.addr %s217, 8
        %s219 = scalar_lea.vmem %s3, %s218
        %s220 = smul.u32 %s38, 2
        %s221 = sadd.s32 %s220, %s39
        %s222 = smul.u32 10, %s221
      $region20: #{run.1} parent=15 // pred_fallthru
        _
      // Predicated region
      $region21: #{run.1} parent=15 // pred_check
        %p223 = pneg %p99
      $region22: #{run.1} parent=15 // pred_check_branch
        %225 = sbr.rel (%p223) target = $region24
      $region23: #{run.1} parent=15 // pred_region
        %s226 = smul.u32 %s38, 2
        %s227 = sadd.s32 %s226, %s39
        %s228 = sld [smem:[#allocation6 + %s227]]
        %s229 = smul.u32 10, %s228
        %p230 = scmp.lt.s32.totalorder %s229, 19
        %s231 = scalar_select %p230, %s229, 19
        %s232 = smul.addr %s231, 8
        %s233 = scalar_lea.vmem %s4, %s232
        %s234 = smul.u32 %s38, 2
        %s235 = sadd.s32 %s234, %s39
        %s236 = sld [smem:[#allocation6 + %s235]]
        %s237 = smul.u32 10, %s236
      $region24: #{run.1} parent=15 // pred_fallthru
        _
      // Predicated region
      $region25: #{run.1} parent=15 // pred_check
        %p238 = pneg %p129
      $region26: #{run.1} parent=15 // pred_check_branch
        %240 = sbr.rel (%p238) target = $region28
      $region27: #{run.1} parent=15 // pred_region
        %s241 = smul.u32 %s38, 2
        %s242 = sadd.s32 %s241, %s39
        %s243 = smul.u32 10, %s242
        %p244 = scmp.lt.s32.totalorder %s243, 39
        %s245 = scalar_select %p244, %s243, 39
        %s246 = smul.addr %s245, 8
        %s247 = scalar_lea.vmem %s5, %s246
        %s248 = smul.u32 %s38, 2
        %s249 = sadd.s32 %s248, %s39
        %s250 = smul.u32 10, %s249
      $region28: #{run.1} parent=15 // pred_fallthru
        _
      // Predicated region
      $region29: #{run.1} parent=15 // pred_check
        %p251 = pneg %p159
      $region30: #{run.1} parent=15 // pred_check_branch
        %253 = sbr.rel (%p251) target = $region32
      $region31: #{run.1} parent=15 // pred_region
        %s254 = smul.u32 %s38, 2
        %s255 = sadd.s32 %s254, %s39
        %s256 = smul.u32 10, %s255
        %p257 = scmp.lt.s32.totalorder %s256, 39
        %s258 = scalar_select %p257, %s256, 39
        %s259 = smul.addr %s258, 8
        %s260 = scalar_lea.vmem %s6, %s259
        %s261 = smul.u32 %s38, 2
        %s262 = sadd.s32 %s261, %s39
        %s263 = smul.u32 10, %s262
      $region32: #{run.1} parent=15 // pred_fallthru
        _
    $region16: #{run.1} parent=5 // pred_fallthru
      _
    %p264 = scmp.le.s32.totalorder 1, %s31
    %p265 = scmp.lt.s32.totalorder %s31, 5
    %p266 = pnand %p264, %p265
    %p267 = pneg %p266
    // Predicated region
    $region33: #{run.1} parent=5 // pred_check
      _
    $region34: #{run.1} parent=5 // pred_check_branch
      %269 = sbr.rel (%p266) target = $region36
    $region35: #{run.1} parent=5 // pred_region
      %s270 = ssub.s32 %s31, 1
      %s271 = smul.u32 %s40, 2
      %s272 = sadd.s32 %s271, %s41
      %s273 = smul.u32 10, %s272
      %p274 = scmp.lt.s32.totalorder %s273, 39
      %s275 = scalar_select %p274, %s273, 39
      %s276 = smul.addr %s275, 8
      %s277 = scalar_lea.vmem %s3, %s276
      %p278 = pneg %p73
      %p279 = pneg %p70
      %s280 = smul.u32 %s40, 2
      %s281 = sadd.s32 %s280, %s41
      %s282 = sld [smem:[#allocation6 + %s281]]
      %s283 = smul.u32 10, %s282
      %p284 = scmp.lt.s32.totalorder %s283, 19
      %s285 = scalar_select %p284, %s283, 19
      %s286 = smul.addr %s285, 8
      %s287 = scalar_lea.vmem %s4, %s286
      %p288 = pneg %p105
      %p289 = pneg %p102
      %s290 = smul.u32 %s40, 2
      %s291 = sadd.s32 %s290, %s41
      %s292 = smul.u32 10, %s291
      %p293 = scmp.lt.s32.totalorder %s292, 39
      %s294 = scalar_select %p293, %s292, 39
      %s295 = smul.addr %s294, 8
      %s296 = scalar_lea.vmem %s5, %s295
      %p297 = pneg %p135
      %p298 = pneg %p132
      %s299 = smul.u32 %s40, 2
      %s300 = sadd.s32 %s299, %s41
      %s301 = smul.u32 10, %s300
      %p302 = scmp.lt.s32.totalorder %s301, 39
      %s303 = scalar_select %p302, %s301, 39
      %s304 = smul.addr %s303, 8
      %s305 = scalar_lea.vmem %s6, %s304
      %p306 = pneg %p165
      %p307 = pneg %p162
      %p308 = pneg %p191
      %p309 = pneg %p188
      %p310 = scmp.lt.s32.totalorder %s40, 1
      %s311 = scalar_select %p310, %s40, 1
      %s312 = smul.addr %s311, 2
      %s313 = smul.addr %s312, 8
      %s314 = scalar_lea.vmem %s7, %s313
      %s315 = smul.u32 %s40, 2
      %s316 = sadd.s32 %s315, %s41
      %s317 = smul.u32 10, %s316
      %p318 = scmp.lt.s32.totalorder %s317, 39
      %s319 = scalar_select %p318, %s317, 39
      %s320 = smul.addr %s319, 8
      %s321 = scalar_lea.vmem %s3, %s320
      %s322 = smul.u32 %s40, 2
      %s323 = sadd.s32 %s322, %s41
      %s324 = smul.u32 10, %s323
      %s325 = smul.u32 %s40, 2
      %s326 = sadd.s32 %s325, %s41
      %s327 = sld [smem:[#allocation6 + %s326]]
      %s328 = smul.u32 10, %s327
      %p329 = scmp.lt.s32.totalorder %s328, 19
      %s330 = scalar_select %p329, %s328, 19
      %s331 = smul.addr %s330, 8
      %s332 = scalar_lea.vmem %s4, %s331
      %s333 = smul.u32 %s40, 2
      %s334 = sadd.s32 %s333, %s41
      %s335 = sld [smem:[#allocation6 + %s334]]
      %s336 = smul.u32 10, %s335
      %s337 = smul.u32 %s40, 2
      %s338 = sadd.s32 %s337, %s41
      %s339 = smul.u32 10, %s338
      %p340 = scmp.lt.s32.totalorder %s339, 39
      %s341 = scalar_select %p340, %s339, 39
      %s342 = smul.addr %s341, 8
      %s343 = scalar_lea.vmem %s5, %s342
      %s344 = smul.u32 %s40, 2
      %s345 = sadd.s32 %s344, %s41
      %s346 = smul.u32 10, %s345
      %s347 = smul.u32 %s40, 2
      %s348 = sadd.s32 %s347, %s41
      %s349 = smul.u32 10, %s348
      %p350 = scmp.lt.s32.totalorder %s349, 39
      %s351 = scalar_select %p350, %s349, 39
      %s352 = smul.addr %s351, 8
      %s353 = scalar_lea.vmem %s6, %s352
      %s354 = smul.u32 %s40, 2
      %s355 = sadd.s32 %s354, %s41
      %s356 = smul.u32 10, %s355
      %p357 = scmp.lt.s32.totalorder %s40, 1
      %s358 = scalar_select %p357, %s40, 1
      %s359 = smul.addr %s358, 2
      %s360 = smul.addr %s359, 8
      %s361 = scalar_lea.vmem %s7, %s360
      %s362 = smul.u32 %s40, 2
      %s363 = sadd.s32 %s362, %s41
      %p364 = scmp.eq.s32.totalorder %s41, 0
      // Predicated region
      $region37: #{run.1} parent=35 // pred_check
        %p365 = pneg %p364
      $region38: #{run.1} parent=35 // pred_check_branch
        %367 = sbr.rel (%p365) target = $region40
      $region39: #{run.1} parent=35 // pred_region
        %368 = vst [vmem:[#allocation2] sm:$0xff] 0.0
        %369 = vst [vmem:[#allocation2 + $0x8] sm:$0xff] 0.0
      $region40: #{run.1} parent=35 // pred_fallthru
        _
      %v370 = vld [vmem:[%s321] sm:$0xff]
      %v371 = vld [vmem:[%s321 + $0x8] sm:$0xff]
      %v372 = vld [vmem:[%s321 + $0x10] sm:$0xff]
      %v373 = vld [vmem:[%s321 + $0x18] sm:$0xff]
      %v374 = vld [vmem:[%s321 + $0x20] sm:$0xff]
      %v375 = vld [vmem:[%s321 + $0x28] sm:$0xff]
      %v376 = vld [vmem:[%s321 + $0x30] sm:$0xff]
      %v377 = vld [vmem:[%s321 + $0x38] sm:$0xff]
      %v378 = vld [vmem:[%s321 + $0x40] sm:$0xff]
      %v379 = vld [vmem:[%s321 + $0x48] sm:$0xff]
      %s380 = sld [smem:[#allocation4 + %s363]]
      %p381 = scmp.eq.s32.totalorder %s380, 0
      // Predicated region
      $region41: #{run.1} parent=35 // pred_check
        %p382 = pneg %p381
      $region42: #{run.1} parent=35 // pred_check_branch
        %384 = sbr.rel (%p382) target = $region44
      $region43: #{run.1} parent=35 // pred_region
        %v385 = vmul.f32 %v370, %v370
        %v386 = vmul.f32 %v371, %v371
        %v387 = vmul.f32 %v372, %v372
        %v388 = vmul.f32 %v373, %v373
        %v389 = vmul.f32 %v374, %v374
        %v390 = vmul.f32 %v375, %v375
        %v391 = vmul.f32 %v376, %v376
        %v392 = vmul.f32 %v377, %v377
        %v393 = vmul.f32 %v378, %v378
        %v394 = vmul.f32 %v379, %v379
        %v395 = vld [vmem:[#allocation2] sm:$0xff]
        %v396 = vld [vmem:[%s343] sm:$0xff]
        %v397 = vld [vmem:[%s343 + $0x8] sm:$0xff]
        %v398 = vld [vmem:[%s343 + $0x10] sm:$0xff]
        %v399 = vld [vmem:[%s343 + $0x18] sm:$0xff]
        %v400 = vld [vmem:[%s343 + $0x20] sm:$0xff]
        %v401 = vld [vmem:[%s343 + $0x28] sm:$0xff]
        %v402 = vld [vmem:[%s343 + $0x30] sm:$0xff]
        %v403 = vld [vmem:[%s343 + $0x38] sm:$0xff]
        %v404 = vld [vmem:[%s343 + $0x40] sm:$0xff]
        %v405 = vld [vmem:[%s343 + $0x48] sm:$0xff]
        %407 = vset.pattern.permute.xlu0 0
        %408 = vperm.xlu0 %407, %v396
        %v409 = vpop.permute.xlu0 %408
        %412 = vset.pattern.permute.xlu0 0
        %413 = vperm.xlu0 %412, %v397
        %v414 = vpop.permute.xlu0 %413
        %417 = vset.pattern.permute.xlu0 0
        %418 = vperm.xlu0 %417, %v398
        %v419 = vpop.permute.xlu0 %418
        %422 = vset.pattern.permute.xlu0 0
        %423 = vperm.xlu0 %422, %v399
        %v424 = vpop.permute.xlu0 %423
        %427 = vset.pattern.permute.xlu0 0
        %428 = vperm.xlu0 %427, %v400
        %v429 = vpop.permute.xlu0 %428
        %432 = vset.pattern.permute.xlu0 0
        %433 = vperm.xlu0 %432, %v401
        %v434 = vpop.permute.xlu0 %433
        %437 = vset.pattern.permute.xlu0 0
        %438 = vperm.xlu0 %437, %v402
        %v439 = vpop.permute.xlu0 %438
        %442 = vset.pattern.permute.xlu0 0
        %443 = vperm.xlu0 %442, %v403
        %v444 = vpop.permute.xlu0 %443
        %447 = vset.pattern.permute.xlu0 0
        %448 = vperm.xlu0 %447, %v404
        %v449 = vpop.permute.xlu0 %448
        %452 = vset.pattern.permute.xlu0 0
        %453 = vperm.xlu0 %452, %v405
        %v454 = vpop.permute.xlu0 %453
        %v456 = vmul.f32 %v385, %v409
        %v457 = vmul.f32 %v386, %v414
        %v458 = vmul.f32 %v387, %v419
        %v459 = vmul.f32 %v388, %v424
        %v460 = vmul.f32 %v389, %v429
        %v461 = vmul.f32 %v390, %v434
        %v462 = vmul.f32 %v391, %v439
        %v463 = vmul.f32 %v392, %v444
        %v464 = vmul.f32 %v393, %v449
        %v465 = vmul.f32 %v394, %v454
        %v466 = vadd.f32 %v456, %v457
        %v467 = vadd.f32 %v466, %v458
        %v468 = vadd.f32 %v467, %v459
        %v469 = vadd.f32 %v468, %v460
        %v470 = vadd.f32 %v469, %v461
        %v471 = vadd.f32 %v470, %v462
        %v472 = vadd.f32 %v471, %v463
        %v473 = vadd.f32 %v472, %v464
        %v474 = vadd.f32 %v473, %v465
        %v475 = vadd.f32 %v395, %v474
        %476 = vst [vmem:[#allocation2] sm:$0xff] %v475
        %s477 = sld [smem:[#allocation5 + %s363]]
        %p478 = scmp.ne.s32.totalorder %s477, 0
        // Predicated region
        $region45: #{run.1} parent=43 // pred_check
          %p479 = pneg %p478
        $region46: #{run.1} parent=43 // pred_check_branch
          %481 = sbr.rel (%p479) target = $region48
        $region47: #{run.1} parent=43 // pred_region
          %s482 = scalar_lea.vmem [#allocation2], 8
          %v483 = vld [vmem:[%s482] sm:$0xff]
          %v484 = vld [vmem:[%s353] sm:$0xff]
          %v485 = vld [vmem:[%s353 + $0x8] sm:$0xff]
          %v486 = vld [vmem:[%s353 + $0x10] sm:$0xff]
          %v487 = vld [vmem:[%s353 + $0x18] sm:$0xff]
          %v488 = vld [vmem:[%s353 + $0x20] sm:$0xff]
          %v489 = vld [vmem:[%s353 + $0x28] sm:$0xff]
          %v490 = vld [vmem:[%s353 + $0x30] sm:$0xff]
          %v491 = vld [vmem:[%s353 + $0x38] sm:$0xff]
          %v492 = vld [vmem:[%s353 + $0x40] sm:$0xff]
          %v493 = vld [vmem:[%s353 + $0x48] sm:$0xff]
          %495 = vset.pattern.permute.xlu0 0
          %496 = vperm.xlu0 %495, %v484
          %v497 = vpop.permute.xlu0 %496
          %500 = vset.pattern.permute.xlu0 0
          %501 = vperm.xlu0 %500, %v485
          %v502 = vpop.permute.xlu0 %501
          %505 = vset.pattern.permute.xlu0 0
          %506 = vperm.xlu0 %505, %v486
          %v507 = vpop.permute.xlu0 %506
          %510 = vset.pattern.permute.xlu0 0
          %511 = vperm.xlu0 %510, %v487
          %v512 = vpop.permute.xlu0 %511
          %515 = vset.pattern.permute.xlu0 0
          %516 = vperm.xlu0 %515, %v488
          %v517 = vpop.permute.xlu0 %516
          %520 = vset.pattern.permute.xlu0 0
          %521 = vperm.xlu0 %520, %v489
          %v522 = vpop.permute.xlu0 %521
          %525 = vset.pattern.permute.xlu0 0
          %526 = vperm.xlu0 %525, %v490
          %v527 = vpop.permute.xlu0 %526
          %530 = vset.pattern.permute.xlu0 0
          %531 = vperm.xlu0 %530, %v491
          %v532 = vpop.permute.xlu0 %531
          %535 = vset.pattern.permute.xlu0 0
          %536 = vperm.xlu0 %535, %v492
          %v537 = vpop.permute.xlu0 %536
          %540 = vset.pattern.permute.xlu0 0
          %541 = vperm.xlu0 %540, %v493
          %v542 = vpop.permute.xlu0 %541
          %v544 = vmul.f32 %v385, %v497
          %v545 = vmul.f32 %v386, %v502
          %v546 = vmul.f32 %v387, %v507
          %v547 = vmul.f32 %v388, %v512
          %v548 = vmul.f32 %v389, %v517
          %v549 = vmul.f32 %v390, %v522
          %v550 = vmul.f32 %v391, %v527
          %v551 = vmul.f32 %v392, %v532
          %v552 = vmul.f32 %v393, %v537
          %v553 = vmul.f32 %v394, %v542
          %v554 = vadd.f32 %v544, %v545
          %v555 = vadd.f32 %v554, %v546
          %v556 = vadd.f32 %v555, %v547
          %v557 = vadd.f32 %v556, %v548
          %v558 = vadd.f32 %v557, %v549
          %v559 = vadd.f32 %v558, %v550
          %v560 = vadd.f32 %v559, %v551
          %v561 = vadd.f32 %v560, %v552
          %v562 = vadd.f32 %v561, %v553
          %v563 = vadd.f32 %v483, %v562
          %564 = vst [vmem:[%s482] sm:$0xff] %v563
        $region48: #{run.1} parent=43 // pred_fallthru
          _
      $region44: #{run.1} parent=35 // pred_fallthru
        _
      %s565 = sld [smem:[#allocation4 + %s363]]
      %p566 = scmp.ne.s32.totalorder %s565, 0
      // Predicated region
      $region49: #{run.1} parent=35 // pred_check
        %p567 = pneg %p566
      $region50: #{run.1} parent=35 // pred_check_branch
        %569 = sbr.rel (%p567) target = $region52
      $region51: #{run.1} parent=35 // pred_region
        %v570 = vld [vmem:[%s332] sm:$0xff]
        %v571 = vld [vmem:[%s332 + $0x8] sm:$0xff]
        %v572 = vld [vmem:[%s332 + $0x10] sm:$0xff]
        %v573 = vld [vmem:[%s332 + $0x18] sm:$0xff]
        %v574 = vld [vmem:[%s332 + $0x20] sm:$0xff]
        %v575 = vld [vmem:[%s332 + $0x28] sm:$0xff]
        %v576 = vld [vmem:[%s332 + $0x30] sm:$0xff]
        %v577 = vld [vmem:[%s332 + $0x38] sm:$0xff]
        %v578 = vld [vmem:[%s332 + $0x40] sm:$0xff]
        %v579 = vld [vmem:[%s332 + $0x48] sm:$0xff]
        %v580 = vsub.f32 %v370, %v570
        %v581 = vsub.f32 %v371, %v571
        %v582 = vsub.f32 %v372, %v572
        %v583 = vsub.f32 %v373, %v573
        %v584 = vsub.f32 %v374, %v574
        %v585 = vsub.f32 %v375, %v575
        %v586 = vsub.f32 %v376, %v576
        %v587 = vsub.f32 %v377, %v577
        %v588 = vsub.f32 %v378, %v578
        %v589 = vsub.f32 %v379, %v579
        %v590 = vand.u32 2147483647, %v580
        %v591 = vand.u32 2147483647, %v581
        %v592 = vand.u32 2147483647, %v582
        %v593 = vand.u32 2147483647, %v583
        %v594 = vand.u32 2147483647, %v584
        %v595 = vand.u32 2147483647, %v585
        %v596 = vand.u32 2147483647, %v586
        %v597 = vand.u32 2147483647, %v587
        %v598 = vand.u32 2147483647, %v588
        %v599 = vand.u32 2147483647, %v589
        %v600 = vld [vmem:[#allocation2] sm:$0xff]
        %v601 = vld [vmem:[%s343] sm:$0xff]
        %v602 = vld [vmem:[%s343 + $0x8] sm:$0xff]
        %v603 = vld [vmem:[%s343 + $0x10] sm:$0xff]
        %v604 = vld [vmem:[%s343 + $0x18] sm:$0xff]
        %v605 = vld [vmem:[%s343 + $0x20] sm:$0xff]
        %v606 = vld [vmem:[%s343 + $0x28] sm:$0xff]
        %v607 = vld [vmem:[%s343 + $0x30] sm:$0xff]
        %v608 = vld [vmem:[%s343 + $0x38] sm:$0xff]
        %v609 = vld [vmem:[%s343 + $0x40] sm:$0xff]
        %v610 = vld [vmem:[%s343 + $0x48] sm:$0xff]
        %612 = vset.pattern.permute.xlu0 0
        %613 = vperm.xlu0 %612, %v601
        %v614 = vpop.permute.xlu0 %613
        %617 = vset.pattern.permute.xlu0 0
        %618 = vperm.xlu0 %617, %v602
        %v619 = vpop.permute.xlu0 %618
        %622 = vset.pattern.permute.xlu0 0
        %623 = vperm.xlu0 %622, %v603
        %v624 = vpop.permute.xlu0 %623
        %627 = vset.pattern.permute.xlu0 0
        %628 = vperm.xlu0 %627, %v604
        %v629 = vpop.permute.xlu0 %628
        %632 = vset.pattern.permute.xlu0 0
        %633 = vperm.xlu0 %632, %v605
        %v634 = vpop.permute.xlu0 %633
        %637 = vset.pattern.permute.xlu0 0
        %638 = vperm.xlu0 %637, %v606
        %v639 = vpop.permute.xlu0 %638
        %642 = vset.pattern.permute.xlu0 0
        %643 = vperm.xlu0 %642, %v607
        %v644 = vpop.permute.xlu0 %643
        %647 = vset.pattern.permute.xlu0 0
        %648 = vperm.xlu0 %647, %v608
        %v649 = vpop.permute.xlu0 %648
        %652 = vset.pattern.permute.xlu0 0
        %653 = vperm.xlu0 %652, %v609
        %v654 = vpop.permute.xlu0 %653
        %657 = vset.pattern.permute.xlu0 0
        %658 = vperm.xlu0 %657, %v610
        %v659 = vpop.permute.xlu0 %658
        %v661 = vmul.f32 %v590, %v614
        %v662 = vmul.f32 %v591, %v619
        %v663 = vmul.f32 %v592, %v624
        %v664 = vmul.f32 %v593, %v629
        %v665 = vmul.f32 %v594, %v634
        %v666 = vmul.f32 %v595, %v639
        %v667 = vmul.f32 %v596, %v644
        %v668 = vmul.f32 %v597, %v649
        %v669 = vmul.f32 %v598, %v654
        %v670 = vmul.f32 %v599, %v659
        %v671 = vadd.f32 %v661, %v662
        %v672 = vadd.f32 %v671, %v663
        %v673 = vadd.f32 %v672, %v664
        %v674 = vadd.f32 %v673, %v665
        %v675 = vadd.f32 %v674, %v666
        %v676 = vadd.f32 %v675, %v667
        %v677 = vadd.f32 %v676, %v668
        %v678 = vadd.f32 %v677, %v669
        %v679 = vadd.f32 %v678, %v670
        %v680 = vadd.f32 %v600, %v679
        %681 = vst [vmem:[#allocation2] sm:$0xff] %v680
        %s682 = sld [smem:[#allocation5 + %s363]]
        %p683 = scmp.ne.s32.totalorder %s682, 0
        // Predicated region
        $region53: #{run.1} parent=51 // pred_check
          %p684 = pneg %p683
        $region54: #{run.1} parent=51 // pred_check_branch
          %686 = sbr.rel (%p684) target = $region56
        $region55: #{run.1} parent=51 // pred_region
          %s687 = scalar_lea.vmem [#allocation2], 8
          %v688 = vld [vmem:[%s687] sm:$0xff]
          %v689 = vld [vmem:[%s353] sm:$0xff]
          %v690 = vld [vmem:[%s353 + $0x8] sm:$0xff]
          %v691 = vld [vmem:[%s353 + $0x10] sm:$0xff]
          %v692 = vld [vmem:[%s353 + $0x18] sm:$0xff]
          %v693 = vld [vmem:[%s353 + $0x20] sm:$0xff]
          %v694 = vld [vmem:[%s353 + $0x28] sm:$0xff]
          %v695 = vld [vmem:[%s353 + $0x30] sm:$0xff]
          %v696 = vld [vmem:[%s353 + $0x38] sm:$0xff]
          %v697 = vld [vmem:[%s353 + $0x40] sm:$0xff]
          %v698 = vld [vmem:[%s353 + $0x48] sm:$0xff]
          %700 = vset.pattern.permute.xlu0 0
          %701 = vperm.xlu0 %700, %v689
          %v702 = vpop.permute.xlu0 %701
          %705 = vset.pattern.permute.xlu0 0
          %706 = vperm.xlu0 %705, %v690
          %v707 = vpop.permute.xlu0 %706
          %710 = vset.pattern.permute.xlu0 0
          %711 = vperm.xlu0 %710, %v691
          %v712 = vpop.permute.xlu0 %711
          %715 = vset.pattern.permute.xlu0 0
          %716 = vperm.xlu0 %715, %v692
          %v717 = vpop.permute.xlu0 %716
          %720 = vset.pattern.permute.xlu0 0
          %721 = vperm.xlu0 %720, %v693
          %v722 = vpop.permute.xlu0 %721
          %725 = vset.pattern.permute.xlu0 0
          %726 = vperm.xlu0 %725, %v694
          %v727 = vpop.permute.xlu0 %726
          %730 = vset.pattern.permute.xlu0 0
          %731 = vperm.xlu0 %730, %v695
          %v732 = vpop.permute.xlu0 %731
          %735 = vset.pattern.permute.xlu0 0
          %736 = vperm.xlu0 %735, %v696
          %v737 = vpop.permute.xlu0 %736
          %740 = vset.pattern.permute.xlu0 0
          %741 = vperm.xlu0 %740, %v697
          %v742 = vpop.permute.xlu0 %741
          %745 = vset.pattern.permute.xlu0 0
          %746 = vperm.xlu0 %745, %v698
          %v747 = vpop.permute.xlu0 %746
          %v749 = vmul.f32 %v590, %v702
          %v750 = vmul.f32 %v591, %v707
          %v751 = vmul.f32 %v592, %v712
          %v752 = vmul.f32 %v593, %v717
          %v753 = vmul.f32 %v594, %v722
          %v754 = vmul.f32 %v595, %v727
          %v755 = vmul.f32 %v596, %v732
          %v756 = vmul.f32 %v597, %v737
          %v757 = vmul.f32 %v598, %v742
          %v758 = vmul.f32 %v599, %v747
          %v759 = vadd.f32 %v749, %v750
          %v760 = vadd.f32 %v759, %v751
          %v761 = vadd.f32 %v760, %v752
          %v762 = vadd.f32 %v761, %v753
          %v763 = vadd.f32 %v762, %v754
          %v764 = vadd.f32 %v763, %v755
          %v765 = vadd.f32 %v764, %v756
          %v766 = vadd.f32 %v765, %v757
          %v767 = vadd.f32 %v766, %v758
          %v768 = vadd.f32 %v688, %v767
          %769 = vst [vmem:[%s687] sm:$0xff] %v768
        $region56: #{run.1} parent=51 // pred_fallthru
          _
      $region52: #{run.1} parent=35 // pred_fallthru
        _
      %p770 = scmp.eq.s32.totalorder %s41, 1
      // Predicated region
      $region57: #{run.1} parent=35 // pred_check
        %p771 = pneg %p770
      $region58: #{run.1} parent=35 // pred_check_branch
        %773 = sbr.rel (%p771) target = $region60
      $region59: #{run.1} parent=35 // pred_region
        %v774 = vld [vmem:[#allocation2] sm:$0xff]
        %v775 = vld [vmem:[#allocation2 + $0x8] sm:$0xff]
        %776 = vst [vmem:[%s361] sm:$0xff] %v774
        %777 = vst [vmem:[%s361 + $0x8] sm:$0xff] %v775
      $region60: #{run.1} parent=35 // pred_fallthru
        _
      %p778 = scmp.lt.s32.totalorder %s40, 1
      %s779 = scalar_select %p778, %s40, 1
      %s780 = smul.addr %s779, 2
      %s781 = smul.addr %s780, 8
      %s782 = scalar_lea.vmem %s7, %s781
      // Predicated region
      $region61: #{run.1} parent=35 // pred_check
        %p783 = pneg %p188
      $region62: #{run.1} parent=35 // pred_check_branch
        %785 = sbr.rel (%p783) target = $region64
      $region63: #{run.1} parent=35 // pred_region
        _
      $region64: #{run.1} parent=35 // pred_fallthru
        _
    $region36: #{run.1} parent=5 // pred_fallthru
      _
    %p786 = scmp.le.s32.totalorder 2, %s31
    // Predicated region
    $region65: #{run.1} parent=5 // pred_check
      %p787 = pneg %p786
    $region66: #{run.1} parent=5 // pred_check_branch
      %789 = sbr.rel (%p787) target = $region68
    $region67: #{run.1} parent=5 // pred_region
      %s790 = ssub.s32 %s31, 2
      // Predicated region
      $region69: #{run.1} parent=67 // pred_check
        %p791 = pneg %p194
      $region70: #{run.1} parent=67 // pred_check_branch
        %793 = sbr.rel (%p791) target = $region72
      $region71: #{run.1} parent=67 // pred_region
        %p794 = scmp.lt.s32.totalorder %s42, 1
        %s795 = scalar_select %p794, %s42, 1
        %s796 = smul.addr %s795, 2
        %s797 = smul.addr %s796, 8
        %s798 = scalar_lea.vmem %s7, %s797
      $region72: #{run.1} parent=67 // pred_fallthru
        _
    $region68: #{run.1} parent=5 // pred_fallthru
      _
  $region6: #{run.1} parent=0 // loop_footer
    %s35 = sadd.s32 1, %s31
  $region7: #{run.1} parent=0 // loop_footer_branch
    %30 = sbr.rel target = $region3
  $region8: #{run.1} parent=0 // loop_exit
    _

</llo_original>
